<compile_context>
chip_gen: v5e
topology: v5e:2x2
jax: 0.10.0
libtpu: 0.0.40
codegen_flags: <defaults>
</compile_context>

<pallas_src>
import jax
import jax.numpy as jnp
from jax.experimental import pallas as pl
from jax.experimental.pallas import tpu as pltpu

LEAKY_SLOPE = 0.01   # F.leaky_relu_ default negative_slope
BN_EPS = 1e-5        # nn.BatchNorm1d default eps
LANE = 128           # TPU lane width / MXU-friendly multiple


def _bn_leaky(h, gamma, beta):
    """Training-mode BatchNorm1d folded into one scale/shift, then LeakyReLU."""
    mu = jnp.mean(h, axis=0, keepdims=True)
    var = jnp.mean((h - mu) ** 2, axis=0, keepdims=True)   # biased variance
    scale = gamma * jax.lax.rsqrt(var + BN_EPS)
    shift = beta - mu * scale
    h = h * scale + shift
    return jnp.maximum(h, LEAKY_SLOPE * h)


def discriminator_kernel(x_ref,
                         w1_ref, g1_ref, be1_ref,
                         w2_ref, g2_ref, be2_ref,
                         w3_ref, b3_ref,
                         o_ref):
    # layer 1: Linear (bias dropped - dead under BN) -> BN -> LeakyReLU
    h = jnp.dot(x_ref[...].astype(jnp.bfloat16), w1_ref[...],
                preferred_element_type=jnp.float32)
    h = _bn_leaky(h, g1_ref[...], be1_ref[...])

    # layer 2: Linear (bias dropped - dead under BN) -> BN -> LeakyReLU
    h = jnp.dot(h.astype(jnp.bfloat16), w2_ref[...],
                preferred_element_type=jnp.float32)
    h = _bn_leaky(h, g2_ref[...], be2_ref[...])

    # layer 3: plain Linear (lane-dense padded output)
    o_ref[...] = (jnp.dot(h.astype(jnp.bfloat16), w3_ref[...],
                          preferred_element_type=jnp.float32)
                  + b3_ref[...]).astype(o_ref.dtype)


def _round_up(n, m):
    return (n + m - 1) // m * m


def _pad_last(a, new_size, value=0.0):
    return jnp.pad(a, [(0, 0)] * (a.ndim - 1) + [(0, new_size - a.shape[-1])],
                   constant_values=value)


def discriminator_forward(x, params):
    (w1, b1, g1, be1, w2, b2, g2, be2, w3, b3) = params
    del b1, b2  # mathematically dead: biases before BatchNorm cancel exactly

    B, in_size = x.shape
    hidden = w1.shape[1]
    out_size = w3.shape[1]

    in_p = _round_up(in_size, LANE)
    hid_p = _round_up(hidden, LANE)
    out_p = _round_up(out_size, LANE)

    # Zero-pad feature dims to lane/MXU multiples (exact; see header comment).
    # Weights are pre-cast to bf16 once here to feed the MXU and halve DMA bytes.
    x_p = _pad_last(x, in_p)
    w1_p = jnp.pad(w1, ((0, in_p - in_size), (0, hid_p - hidden))).astype(jnp.bfloat16)
    w2_p = jnp.pad(w2, ((0, hid_p - hidden), (0, hid_p - hidden))).astype(jnp.bfloat16)
    w3_p = jnp.pad(w3, ((0, hid_p - hidden), (0, out_p - out_size))).astype(jnp.bfloat16)
    g1_p = _pad_last(g1, hid_p, value=1.0)
    g2_p = _pad_last(g2, hid_p, value=1.0)
    be1_p = _pad_last(be1, hid_p)
    be2_p = _pad_last(be2, hid_p)
    b3_p = _pad_last(b3, out_p)

    vmem = pl.BlockSpec(memory_space=pltpu.VMEM)
    out_padded = pl.pallas_call(
        discriminator_kernel,
        out_shape=jax.ShapeDtypeStruct((B, out_p), jnp.float32),
        in_specs=[vmem] * 9,
        out_specs=vmem,
    )(x_p, w1_p, g1_p, be1_p, w2_p, g2_p, be2_p, w3_p, b3_p)

    return out_padded[:, :out_size]


def init_params(key, input_size, hidden_size, output_size):
    """PyTorch-default init. Linear W ~ U(-1/sqrt(fan_in), 1/sqrt(fan_in)),
    BN gamma=1, beta=0.  Linear weights stored pre-transposed as (in, out)."""
    ks = jax.random.split(key, 6)

    def linear(kw, kb, fan_in, fan_out):
        bound = 1.0 / jnp.sqrt(fan_in)
        w = jax.random.uniform(kw, (fan_in, fan_out), jnp.float32, -bound, bound)
        b = jax.random.uniform(kb, (1, fan_out), jnp.float32, -bound, bound)
        return w, b

    w1, b1 = linear(ks[0], ks[1], input_size, hidden_size)
    w2, b2 = linear(ks[2], ks[3], hidden_size, hidden_size)
    w3, b3 = linear(ks[4], ks[5], hidden_size, output_size)

    g1 = jnp.ones((1, hidden_size), jnp.float32)
    be1 = jnp.zeros((1, hidden_size), jnp.float32)
    g2 = jnp.ones((1, hidden_size), jnp.float32)
    be2 = jnp.zeros((1, hidden_size), jnp.float32)

    return (w1, b1, g1, be1, w2, b2, g2, be2, w3, b3)


def reference_forward_f32(x, params):
    """Full-f32 PyTorch-equivalent forward (with the redundant pre-BN biases)."""
    (w1, b1, g1, be1, w2, b2, g2, be2, w3, b3) = params

    def bn(h, g, be):
        mu = jnp.mean(h, axis=0, keepdims=True)
        var = jnp.mean((h - mu) ** 2, axis=0, keepdims=True)
        return (h - mu) * jax.lax.rsqrt(var + BN_EPS) * g + be

    def leaky(h):
        return jnp.where(h >= 0, h, LEAKY_SLOPE * h)

    h = leaky(bn(x @ w1 + b1, g1, be1))
    h = leaky(bn(h @ w2 + b2, g2, be2))
    return h @ w3 + b3


def reference_forward_matched(x, params):
    """Plain-JAX reference mirroring the kernel's math (dropped pre-BN biases,
    bf16 matmul inputs with f32 accumulation, folded BN)."""
    (w1, b1, g1, be1, w2, b2, g2, be2, w3, b3) = params
    h = jnp.dot(x.astype(jnp.bfloat16), w1.astype(jnp.bfloat16),
                preferred_element_type=jnp.float32)
    h = _bn_leaky(h, g1, be1)
    h = jnp.dot(h.astype(jnp.bfloat16), w2.astype(jnp.bfloat16),
                preferred_element_type=jnp.float32)
    h = _bn_leaky(h, g2, be2)
    return jnp.dot(h.astype(jnp.bfloat16), w3.astype(jnp.bfloat16),
                   preferred_element_type=jnp.float32) + b3


if __name__ == "__main__":
    B, INPUT_SIZE, HIDDEN_SIZE, OUTPUT_SIZE = 8, 16, 32, 1

    key = jax.random.PRNGKey(0)
    kx, kp = jax.random.split(key)
    x = jax.random.normal(kx, (B, INPUT_SIZE), jnp.float32)
    params = init_params(kp, INPUT_SIZE, HIDDEN_SIZE, OUTPUT_SIZE)

    out = discriminator_forward(x, params)
    jax.block_until_ready(out)
    assert out.shape == (B, OUTPUT_SIZE)

    # Tight check against a reference with the same precision choices.
    ref_matched = reference_forward_matched(x, params)
    assert jnp.allclose(out, ref_matched, atol=2e-3, rtol=2e-3)

    # Semantic check against the full-f32 PyTorch-equivalent forward
    # (bf16 matmul inputs introduce ~1% error at these magnitudes).
    ref_f32 = reference_forward_f32(x, params)
    assert jnp.allclose(out, ref_f32, atol=1e-1, rtol=1e-1)

    print("KERNEL_OK")
</pallas_src>

<mosaic_0001>
module attributes {stable_mosaic.version = 11 : i64} {
  func.func @discriminator_kernel(%arg0: memref<8x128xf32, #tpu.memory_space<vmem>>, %arg1: memref<128x128xbf16, #tpu.memory_space<vmem>>, %arg2: memref<1x128xf32, #tpu.memory_space<vmem>>, %arg3: memref<1x128xf32, #tpu.memory_space<vmem>>, %arg4: memref<128x128xbf16, #tpu.memory_space<vmem>>, %arg5: memref<1x128xf32, #tpu.memory_space<vmem>>, %arg6: memref<1x128xf32, #tpu.memory_space<vmem>>, %arg7: memref<128x128xbf16, #tpu.memory_space<vmem>>, %arg8: memref<1x128xf32, #tpu.memory_space<vmem>>, %arg9: memref<8x128xf32, #tpu.memory_space<vmem>>) attributes {dimension_semantics = [], scalar_prefetch = 0 : i64, scratch_operands = 0 : i64, tpu.core_type = #tpu.core_type<tc>} {
    %c0 = arith.constant 0 : index
    %c0_0 = arith.constant 0 : index
    %0 = vector.load %arg0[%c0, %c0_0] : memref<8x128xf32, #tpu.memory_space<vmem>>, vector<8x128xf32>
    %1 = arith.truncf %0 : vector<8x128xf32> to vector<8x128xbf16>
    %c0_1 = arith.constant 0 : index
    %c0_2 = arith.constant 0 : index
    %2 = vector.load %arg1[%c0_1, %c0_2] : memref<128x128xbf16, #tpu.memory_space<vmem>>, vector<128x128xbf16>
    %cst = arith.constant dense<0.000000e+00> : vector<8x128xf32>
    %3 = tpu.matmul %1, %2, %cst {dimension_numbers = #tpu.dot_dimension_numbers<[1], [0], [0], [1], [0, 0, 1, 1], [], []>} : vector<8x128xbf16>, vector<128x128xbf16>, vector<8x128xf32> -> vector<8x128xf32>
    %c0_3 = arith.constant 0 : index
    %c0_4 = arith.constant 0 : index
    %4 = vector.load %arg2[%c0_3, %c0_4] : memref<1x128xf32, #tpu.memory_space<vmem>>, vector<1x128xf32>
    %c0_5 = arith.constant 0 : index
    %c0_6 = arith.constant 0 : index
    %5 = vector.load %arg3[%c0_5, %c0_6] : memref<1x128xf32, #tpu.memory_space<vmem>>, vector<1x128xf32>
    %cst_7 = arith.constant dense<0.000000e+00> : vector<128xf32>
    %6 = vector.multi_reduction <add>, %3, %cst_7 [0] : vector<8x128xf32> to vector<128xf32>
    %7 = vector.shape_cast %6 : vector<128xf32> to vector<1x128xf32>
    %cst_8 = arith.constant 8.000000e+00 : f32
    %8 = vector.broadcast %cst_8 : f32 to vector<1x128xf32>
    %9 = arith.divf %7, %8 : vector<1x128xf32>
    %10 = vector.broadcast %9 : vector<1x128xf32> to vector<8x128xf32>
    %11 = arith.subf %3, %10 : vector<8x128xf32>
    %12 = arith.mulf %11, %11 : vector<8x128xf32>
    %cst_9 = arith.constant dense<0.000000e+00> : vector<128xf32>
    %13 = vector.multi_reduction <add>, %12, %cst_9 [0] : vector<8x128xf32> to vector<128xf32>
    %14 = vector.shape_cast %13 : vector<128xf32> to vector<1x128xf32>
    %cst_10 = arith.constant 8.000000e+00 : f32
    %15 = vector.broadcast %cst_10 : f32 to vector<1x128xf32>
    %16 = arith.divf %14, %15 : vector<1x128xf32>
    %cst_11 = arith.constant 9.99999974E-6 : f32
    %17 = vector.broadcast %cst_11 : f32 to vector<1x128xf32>
    %18 = arith.addf %16, %17 : vector<1x128xf32>
    %19 = math.rsqrt %18 : vector<1x128xf32>
    %20 = arith.mulf %4, %19 : vector<1x128xf32>
    %21 = arith.mulf %9, %20 : vector<1x128xf32>
    %22 = arith.subf %5, %21 : vector<1x128xf32>
    %23 = vector.broadcast %20 : vector<1x128xf32> to vector<8x128xf32>
    %24 = arith.mulf %3, %23 : vector<8x128xf32>
    %25 = vector.broadcast %22 : vector<1x128xf32> to vector<8x128xf32>
    %26 = arith.addf %24, %25 : vector<8x128xf32>
    %cst_12 = arith.constant 0.00999999977 : f32
    %27 = vector.broadcast %cst_12 : f32 to vector<8x128xf32>
    %28 = arith.mulf %27, %26 : vector<8x128xf32>
    %29 = arith.maximumf %26, %28 : vector<8x128xf32>
    %30 = arith.truncf %29 : vector<8x128xf32> to vector<8x128xbf16>
    %c0_13 = arith.constant 0 : index
    %c0_14 = arith.constant 0 : index
    %31 = vector.load %arg4[%c0_13, %c0_14] : memref<128x128xbf16, #tpu.memory_space<vmem>>, vector<128x128xbf16>
    %cst_15 = arith.constant dense<0.000000e+00> : vector<8x128xf32>
    %32 = tpu.matmul %30, %31, %cst_15 {dimension_numbers = #tpu.dot_dimension_numbers<[1], [0], [0], [1], [0, 0, 1, 1], [], []>} : vector<8x128xbf16>, vector<128x128xbf16>, vector<8x128xf32> -> vector<8x128xf32>
    %c0_16 = arith.constant 0 : index
    %c0_17 = arith.constant 0 : index
    %33 = vector.load %arg5[%c0_16, %c0_17] : memref<1x128xf32, #tpu.memory_space<vmem>>, vector<1x128xf32>
    %c0_18 = arith.constant 0 : index
    %c0_19 = arith.constant 0 : index
    %34 = vector.load %arg6[%c0_18, %c0_19] : memref<1x128xf32, #tpu.memory_space<vmem>>, vector<1x128xf32>
    %cst_20 = arith.constant dense<0.000000e+00> : vector<128xf32>
    %35 = vector.multi_reduction <add>, %32, %cst_20 [0] : vector<8x128xf32> to vector<128xf32>
    %36 = vector.shape_cast %35 : vector<128xf32> to vector<1x128xf32>
    %cst_21 = arith.constant 8.000000e+00 : f32
    %37 = vector.broadcast %cst_21 : f32 to vector<1x128xf32>
    %38 = arith.divf %36, %37 : vector<1x128xf32>
    %39 = vector.broadcast %38 : vector<1x128xf32> to vector<8x128xf32>
    %40 = arith.subf %32, %39 : vector<8x128xf32>
    %41 = arith.mulf %40, %40 : vector<8x128xf32>
    %cst_22 = arith.constant dense<0.000000e+00> : vector<128xf32>
    %42 = vector.multi_reduction <add>, %41, %cst_22 [0] : vector<8x128xf32> to vector<128xf32>
    %43 = vector.shape_cast %42 : vector<128xf32> to vector<1x128xf32>
    %cst_23 = arith.constant 8.000000e+00 : f32
    %44 = vector.broadcast %cst_23 : f32 to vector<1x128xf32>
    %45 = arith.divf %43, %44 : vector<1x128xf32>
    %cst_24 = arith.constant 9.99999974E-6 : f32
    %46 = vector.broadcast %cst_24 : f32 to vector<1x128xf32>
    %47 = arith.addf %45, %46 : vector<1x128xf32>
    %48 = math.rsqrt %47 : vector<1x128xf32>
    %49 = arith.mulf %33, %48 : vector<1x128xf32>
    %50 = arith.mulf %38, %49 : vector<1x128xf32>
    %51 = arith.subf %34, %50 : vector<1x128xf32>
    %52 = vector.broadcast %49 : vector<1x128xf32> to vector<8x128xf32>
    %53 = arith.mulf %32, %52 : vector<8x128xf32>
    %54 = vector.broadcast %51 : vector<1x128xf32> to vector<8x128xf32>
    %55 = arith.addf %53, %54 : vector<8x128xf32>
    %cst_25 = arith.constant 0.00999999977 : f32
    %56 = vector.broadcast %cst_25 : f32 to vector<8x128xf32>
    %57 = arith.mulf %56, %55 : vector<8x128xf32>
    %58 = arith.maximumf %55, %57 : vector<8x128xf32>
    %59 = arith.truncf %58 : vector<8x128xf32> to vector<8x128xbf16>
    %c0_26 = arith.constant 0 : index
    %c0_27 = arith.constant 0 : index
    %60 = vector.load %arg7[%c0_26, %c0_27] : memref<128x128xbf16, #tpu.memory_space<vmem>>, vector<128x128xbf16>
    %cst_28 = arith.constant dense<0.000000e+00> : vector<8x128xf32>
    %61 = tpu.matmul %59, %60, %cst_28 {dimension_numbers = #tpu.dot_dimension_numbers<[1], [0], [0], [1], [0, 0, 1, 1], [], []>} : vector<8x128xbf16>, vector<128x128xbf16>, vector<8x128xf32> -> vector<8x128xf32>
    %c0_29 = arith.constant 0 : index
    %c0_30 = arith.constant 0 : index
    %62 = vector.load %arg8[%c0_29, %c0_30] : memref<1x128xf32, #tpu.memory_space<vmem>>, vector<1x128xf32>
    %63 = vector.broadcast %62 : vector<1x128xf32> to vector<8x128xf32>
    %64 = arith.addf %61, %63 : vector<8x128xf32>
    %c0_31 = arith.constant 0 : index
    %c0_32 = arith.constant 0 : index
    %65 = vector.load %arg9[%c0_31, %c0_32] : memref<8x128xf32, #tpu.memory_space<vmem>>, vector<8x128xf32>
    tpu.vector_store %arg9[%c0_31, %c0_32], %64 {strides = array<i32>} : memref<8x128xf32, #tpu.memory_space<vmem>>, vector<8x128xf32>,
    return
  }
}

</mosaic_0001>

<llo_original>
// kernel: tpu_custom_call.1
$region0: #{tpu_custom_call.1}
  #allocation0 [shape = 'u32[]', space=smem, size = 0x4, offset = 0x4, fixed_abs, tag = 'smem constant byte address 0x4 - core index']
  #allocation1 [shape = 'u32[72,128]{1,0:T(1,128)}', space=vmem, size = 0x9000, scoped, tag = 'internal scratch']
  %s0 = inlined_call_operand.hbm [shape: f32[8,128], index: 0, kind: input, shape index: {}]
  %s1 = inlined_call_operand.hbm [shape: bf16[128,128], index: 1, kind: input, shape index: {}]
  %s2 = inlined_call_operand.vmem [shape: f32[1,128], index: 2, kind: input, shape index: {}]
  %s3 = inlined_call_operand.vmem [shape: f32[1,128], index: 3, kind: input, shape index: {}]
  %s4 = inlined_call_operand.hbm [shape: bf16[128,128], index: 4, kind: input, shape index: {}]
  %s5 = inlined_call_operand.vmem [shape: f32[1,128], index: 5, kind: input, shape index: {}]
  %s6 = inlined_call_operand.vmem [shape: f32[1,128], index: 6, kind: input, shape index: {}]
  %s7 = inlined_call_operand.hbm [shape: bf16[128,128], index: 7, kind: input, shape index: {}]
  %s8 = inlined_call_operand.vmem [shape: f32[1,128], index: 8, kind: input, shape index: {}]
  %s9 = inlined_call_operand.hbm [shape: f32[8,128], index: 9, kind: output, shape index: {}]
  %s10 = sld [smem:[#allocation0]]
  $region62: #{tpu_custom_call.1} parent=0
    _
  %s12 = ssub.s32 1, %s10
  %s13 = scalar_select 0, %s12, %s10
  $region1: #{tpu_custom_call.1} parent=0
    #allocation2 [shape = 'u8[4096]{0}', space=vmem, size = 0x1000, scoped, tag = 'input window, operand 0, single buffered']
    #allocation3 [shape = 's32[1]{0}', space=sflag, size = 0x4, scoped, tag = 'scoped memory for tpu_custom_call.1']
    #allocation4 [shape = 's32[1]{0}', space=sflag, size = 0x4, scoped, tag = 'scoped memory for tpu_custom_call.1']
    #allocation5 [shape = 'u8[32768]{0}', space=vmem, size = 0x8000, scoped, tag = 'input window, operand 1, single buffered']
    #allocation6 [shape = 's32[1]{0}', space=sflag, size = 0x4, scoped, tag = 'scoped memory for tpu_custom_call.1']
    #allocation7 [shape = 'u8[32768]{0}', space=vmem, size = 0x8000, scoped, tag = 'input window, operand 4, single buffered']
    #allocation8 [shape = 'u8[32768]{0}', space=vmem, size = 0x8000, scoped, tag = 'input window, operand 7, single buffered']
    #allocation9 [shape = 's32[1]{0}', space=sflag, size = 0x4, scoped, tag = 'scoped memory for tpu_custom_call.1']
    #allocation10 [shape = 'u8[4096]{0}', space=vmem, size = 0x1000, scoped, tag = 'output window, operand 0, single buffered']
    %14 = vsyncpa [#allocation3], 0
    %15 = vsyncpa [#allocation6], 0
    %16 = vsyncpa [#allocation9], 0
    %17 = vsyncpa [#allocation4], 0
    // Predicated region
    $region2: #{tpu_custom_call.1} parent=1 // pred_check
      _
    $region3: #{tpu_custom_call.1} parent=1 // pred_check_branch
      %19 = sbr.rel (0) target = $region5
    $region4: #{tpu_custom_call.1} parent=1 // pred_region
      %21 = vsyncadd [#allocation3], 0
      %s23 = sshll.u32 %s0, 4
      %s24 = int_to_ptr.hbm [resolvable:$true] %s23
      %s25 = sshll.u32 [#allocation2], 4
      %s26 = int_to_ptr.vmem [resolvable:$true] %s25
      %28 = dma.hbm_to_vmem [thread:$0]  %s24, 128, %s26, [#allocation3]
    $region5: #{tpu_custom_call.1} parent=1 // pred_fallthru
      _
    // Predicated region
    $region6: #{tpu_custom_call.1} parent=1 // pred_check
      _
    $region7: #{tpu_custom_call.1} parent=1 // pred_check_branch
      %30 = sbr.rel (0) target = $region9
    $region8: #{tpu_custom_call.1} parent=1 // pred_region
      %32 = vsyncadd [#allocation6], 0
      %s33 = sshll.u32 %s1, 4
      %s34 = int_to_ptr.hbm [resolvable:$true] %s33
      %s35 = sshll.u32 [#allocation5], 4
      %s36 = int_to_ptr.vmem [resolvable:$true] %s35
      %41 = dma.hbm_to_vmem [thread:$0]  %s34, 1024, %s36, [#allocation6], 64, 64, 4
    $region9: #{tpu_custom_call.1} parent=1 // pred_fallthru
      _
    // Predicated region
    $region10: #{tpu_custom_call.1} parent=1 // pred_check
      _
    $region11: #{tpu_custom_call.1} parent=1 // pred_check_branch
      %43 = sbr.rel (0) target = $region13
    $region12: #{tpu_custom_call.1} parent=1 // pred_region
      _
    $region13: #{tpu_custom_call.1} parent=1 // pred_fallthru
      _
    // Predicated region
    $region14: #{tpu_custom_call.1} parent=1 // pred_check
      _
    $region15: #{tpu_custom_call.1} parent=1 // pred_check_branch
      %45 = sbr.rel (0) target = $region17
    $region16: #{tpu_custom_call.1} parent=1 // pred_region
      _
    $region17: #{tpu_custom_call.1} parent=1 // pred_fallthru
      _
    // Predicated region
    $region18: #{tpu_custom_call.1} parent=1 // pred_check
      _
    $region19: #{tpu_custom_call.1} parent=1 // pred_check_branch
      %47 = sbr.rel (0) target = $region21
    $region20: #{tpu_custom_call.1} parent=1 // pred_region
      %49 = vsyncadd [#allocation6], 0
      %s50 = sshll.u32 %s4, 4
      %s51 = int_to_ptr.hbm [resolvable:$true] %s50
      %s52 = sshll.u32 [#allocation7], 4
      %s53 = int_to_ptr.vmem [resolvable:$true] %s52
      %58 = dma.hbm_to_vmem [thread:$0]  %s51, 1024, %s53, [#allocation6], 64, 64, 4
    $region21: #{tpu_custom_call.1} parent=1 // pred_fallthru
      _
    // Predicated region
    $region22: #{tpu_custom_call.1} parent=1 // pred_check
      _
    $region23: #{tpu_custom_call.1} parent=1 // pred_check_branch
      %60 = sbr.rel (0) target = $region25
    $region24: #{tpu_custom_call.1} parent=1 // pred_region
      _
    $region25: #{tpu_custom_call.1} parent=1 // pred_fallthru
      _
    // Predicated region
    $region26: #{tpu_custom_call.1} parent=1 // pred_check
      _
    $region27: #{tpu_custom_call.1} parent=1 // pred_check_branch
      %62 = sbr.rel (0) target = $region29
    $region28: #{tpu_custom_call.1} parent=1 // pred_region
      _
    $region29: #{tpu_custom_call.1} parent=1 // pred_fallthru
      _
    // Predicated region
    $region30: #{tpu_custom_call.1} parent=1 // pred_check
      _
    $region31: #{tpu_custom_call.1} parent=1 // pred_check_branch
      %64 = sbr.rel (0) target = $region33
    $region32: #{tpu_custom_call.1} parent=1 // pred_region
      %66 = vsyncadd [#allocation9], 0
      %s67 = sshll.u32 %s7, 4
      %s68 = int_to_ptr.hbm [resolvable:$true] %s67
      %s69 = sshll.u32 [#allocation8], 4
      %s70 = int_to_ptr.vmem [resolvable:$true] %s69
      %75 = dma.hbm_to_vmem [thread:$0]  %s68, 1024, %s70, [#allocation9], 64, 64, 4
    $region33: #{tpu_custom_call.1} parent=1 // pred_fallthru
      _
    // Predicated region
    $region34: #{tpu_custom_call.1} parent=1 // pred_check
      _
    $region35: #{tpu_custom_call.1} parent=1 // pred_check_branch
      %77 = sbr.rel (0) target = $region37
    $region36: #{tpu_custom_call.1} parent=1 // pred_region
      _
    $region37: #{tpu_custom_call.1} parent=1 // pred_fallthru
      _
    // Predicated region
    $region38: #{tpu_custom_call.1} parent=1 // pred_check
      _
    $region39: #{tpu_custom_call.1} parent=1 // pred_check_branch
      %79 = sbr.rel (0) target = $region41
    $region40: #{tpu_custom_call.1} parent=1 // pred_region
      %81 = dma.done [#allocation3], 128
    $region41: #{tpu_custom_call.1} parent=1 // pred_fallthru
      _
    // Predicated region
    $region42: #{tpu_custom_call.1} parent=1 // pred_check
      _
    $region43: #{tpu_custom_call.1} parent=1 // pred_check_branch
      %83 = sbr.rel (0) target = $region45
    $region44: #{tpu_custom_call.1} parent=1 // pred_region
      %85 = dma.done [#allocation6], 1024
    $region45: #{tpu_custom_call.1} parent=1 // pred_fallthru
      _
    // Predicated region
    $region46: #{tpu_custom_call.1} parent=1 // pred_check
      _
    $region47: #{tpu_custom_call.1} parent=1 // pred_check_branch
      %87 = sbr.rel (0) target = $region49
    $region48: #{tpu_custom_call.1} parent=1 // pred_region
      %89 = dma.done [#allocation6], 1024
    $region49: #{tpu_custom_call.1} parent=1 // pred_fallthru
      _
    // Predicated region
    $region50: #{tpu_custom_call.1} parent=1 // pred_check
      _
    $region51: #{tpu_custom_call.1} parent=1 // pred_check_branch
      %91 = sbr.rel (0) target = $region53
    $region52: #{tpu_custom_call.1} parent=1 // pred_region
      %93 = dma.done [#allocation9], 1024
    $region53: #{tpu_custom_call.1} parent=1 // pred_fallthru
      _
    %v94 = vld [vmem:[#allocation2] sm:$0xff]
    %v95 = vpack.c.bf16 %v94, %v94
    %v96 = vld [vmem:[#allocation5] sm:$0xf]
    %v97 = vld [vmem:[#allocation5 + $0x4] sm:$0xf]
    %v98 = vld [vmem:[#allocation5 + $0x8] sm:$0xf]
    %v99 = vld [vmem:[#allocation5 + $0xc] sm:$0xf]
    %v100 = vld [vmem:[#allocation5 + $0x10] sm:$0xf]
    %v101 = vld [vmem:[#allocation5 + $0x14] sm:$0xf]
    %v102 = vld [vmem:[#allocation5 + $0x18] sm:$0xf]
    %v103 = vld [vmem:[#allocation5 + $0x1c] sm:$0xf]
    %v104 = vld [vmem:[#allocation5 + $0x20] sm:$0xf]
    %v105 = vld [vmem:[#allocation5 + $0x24] sm:$0xf]
    %v106 = vld [vmem:[#allocation5 + $0x28] sm:$0xf]
    %v107 = vld [vmem:[#allocation5 + $0x2c] sm:$0xf]
    %v108 = vld [vmem:[#allocation5 + $0x30] sm:$0xf]
    %v109 = vld [vmem:[#allocation5 + $0x34] sm:$0xf]
    %v110 = vld [vmem:[#allocation5 + $0x38] sm:$0xf]
    %v111 = vld [vmem:[#allocation5 + $0x3c] sm:$0xf]
    %v128 = vunpack.c.l.b16 %v96
    %v129 = vunpack.c.l.b16 %v97
    %v130 = vunpack.c.l.b16 %v98
    %v131 = vunpack.c.l.b16 %v99
    %v132 = vunpack.c.l.b16 %v100
    %v133 = vunpack.c.l.b16 %v101
    %v134 = vunpack.c.l.b16 %v102
    %v135 = vunpack.c.l.b16 %v103
    %v136 = vunpack.c.l.b16 %v104
    %v137 = vunpack.c.l.b16 %v105
    %v138 = vunpack.c.l.b16 %v106
    %v139 = vunpack.c.l.b16 %v107
    %v140 = vunpack.c.l.b16 %v108
    %v141 = vunpack.c.l.b16 %v109
    %v142 = vunpack.c.l.b16 %v110
    %v143 = vunpack.c.l.b16 %v111
    %v144 = vpack.c.b16 %v129, %v128
    %v145 = vpack.c.b16 %v131, %v130
    %v146 = vpack.c.b16 %v133, %v132
    %v147 = vpack.c.b16 %v135, %v134
    %v148 = vpack.c.b16 %v137, %v136
    %v149 = vpack.c.b16 %v139, %v138
    %v150 = vpack.c.b16 %v141, %v140
    %v151 = vpack.c.b16 %v143, %v142
    %160 = vmatpush.bf16.msra.mxu0 %v151
    %161 = vmatpush.bf16.msra.mxu0 %v150
    %162 = vmatpush.bf16.msra.mxu0 %v149
    %163 = vmatpush.bf16.msra.mxu0 %v148
    %164 = vmatpush.bf16.msra.mxu0 %v147
    %165 = vmatpush.bf16.msra.mxu0 %v146
    %166 = vmatpush.bf16.msra.mxu0 %v145
    %167 = vmatpush.bf16.msra.mxu0 %v144
    %168 = vmatmul.bf16.gmra.mxu0 %v95
    %v169 = vpop.f32.mrf.mxu0
    %v170 = vadd.f32 0.0, %v169
    %v171 = vpop.f32.mrf.mxu0
    %172 = vdwg.mxu0
    %v173 = vld [vmem:[%s2] sm:$0x1]
    %v174 = vld [vmem:[%s3] sm:$0x1]
    %v175 = vrot.slane %v170, 4
    %v176 = vadd.f32 %v170, %v175
    %v177 = vrot.slane %v176, 2
    %v178 = vadd.f32 %v176, %v177
    %v179 = vrot.slane %v178, 1
    %v180 = vadd.f32 %v178, %v179
    %v181 = vrcp.pop 8.0
    %v182 = vmul.f32 8.0, %v181
    %v183 = vsub.f32 1.0, %v182
    %v184 = vmul.f32 %v181, %v183
    %v185 = vadd.f32 %v181, %v184
    %vm186 = vweird.f32 %v181
    %v187 = vsel %vm186, %v181, %v185
    %v188 = vmul.f32 %v180, %v187
    %v189 = vsub.f32 %v170, %v188
    %v190 = vmul.f32 %v189, %v189
    %v191 = vrot.slane %v190, 4
    %v192 = vadd.f32 %v190, %v191
    %v193 = vrot.slane %v192, 2
    %v194 = vadd.f32 %v192, %v193
    %v195 = vrot.slane %v194, 1
    %v196 = vadd.f32 %v194, %v195
    %v197 = vmul.f32 %v196, %v187
    %v198 = vadd.f32 %v197, 1e-05
    %v199 = vrsqrt.pop %v198
    %v200 = vmul.f32 %v199, %v198
    %v201 = vmul.f32 %v200, %v199
    %v202 = vmul.f32 0.5, %v201
    %v203 = vsub.f32 1.5, %v202
    %v204 = vmul.f32 %v199, %v203
    %vm205 = vweird.f32 %v198
    %vm206 = vweird.f32 %v199
    %vm207 = vmor %vm205, %vm206
    %v208 = vsel %vm207, %v199, %v204
    %v209 = vmul.f32 %v173, %v208
    %v210 = vmul.f32 %v188, %v209
    %v211 = vsub.f32 %v174, %v210
    %v213 = vperm.slane %v209, 0
    %v215 = vmul.f32 %v170, %v213
    %v217 = vperm.slane %v211, 0
    %v219 = vadd.f32 %v215, %v217
    %v220 = vmul.f32 %v219, 0.01
    %v221 = vmax.f32 %v219, %v220
    %v222 = vpack.c.bf16 %v221, %v221
    %v223 = vld [vmem:[#allocation7] sm:$0xf]
    %v224 = vld [vmem:[#allocation7 + $0x4] sm:$0xf]
    %v225 = vld [vmem:[#allocation7 + $0x8] sm:$0xf]
    %v226 = vld [vmem:[#allocation7 + $0xc] sm:$0xf]
    %v227 = vld [vmem:[#allocation7 + $0x10] sm:$0xf]
    %v228 = vld [vmem:[#allocation7 + $0x14] sm:$0xf]
    %v229 = vld [vmem:[#allocation7 + $0x18] sm:$0xf]
    %v230 = vld [vmem:[#allocation7 + $0x1c] sm:$0xf]
    %v231 = vld [vmem:[#allocation7 + $0x20] sm:$0xf]
    %v232 = vld [vmem:[#allocation7 + $0x24] sm:$0xf]
    %v233 = vld [vmem:[#allocation7 + $0x28] sm:$0xf]
    %v234 = vld [vmem:[#allocation7 + $0x2c] sm:$0xf]
    %v235 = vld [vmem:[#allocation7 + $0x30] sm:$0xf]
    %v236 = vld [vmem:[#allocation7 + $0x34] sm:$0xf]
    %v237 = vld [vmem:[#allocation7 + $0x38] sm:$0xf]
    %v238 = vld [vmem:[#allocation7 + $0x3c] sm:$0xf]
    %v255 = vunpack.c.l.b16 %v223
    %v256 = vunpack.c.l.b16 %v224
    %v257 = vunpack.c.l.b16 %v225
    %v258 = vunpack.c.l.b16 %v226
    %v259 = vunpack.c.l.b16 %v227
    %v260 = vunpack.c.l.b16 %v228
    %v261 = vunpack.c.l.b16 %v229
    %v262 = vunpack.c.l.b16 %v230
    %v263 = vunpack.c.l.b16 %v231
    %v264 = vunpack.c.l.b16 %v232
    %v265 = vunpack.c.l.b16 %v233
    %v266 = vunpack.c.l.b16 %v234
    %v267 = vunpack.c.l.b16 %v235
    %v268 = vunpack.c.l.b16 %v236
    %v269 = vunpack.c.l.b16 %v237
    %v270 = vunpack.c.l.b16 %v238
    %v271 = vpack.c.b16 %v256, %v255
    %v272 = vpack.c.b16 %v258, %v257
    %v273 = vpack.c.b16 %v260, %v259
    %v274 = vpack.c.b16 %v262, %v261
    %v275 = vpack.c.b16 %v264, %v263
    %v276 = vpack.c.b16 %v266, %v265
    %v277 = vpack.c.b16 %v268, %v267
    %v278 = vpack.c.b16 %v270, %v269
    %287 = vmatpush.bf16.msra.mxu0 %v278
    %288 = vmatpush.bf16.msra.mxu0 %v277
    %289 = vmatpush.bf16.msra.mxu0 %v276
    %290 = vmatpush.bf16.msra.mxu0 %v275
    %291 = vmatpush.bf16.msra.mxu0 %v274
    %292 = vmatpush.bf16.msra.mxu0 %v273
    %293 = vmatpush.bf16.msra.mxu0 %v272
    %294 = vmatpush.bf16.msra.mxu0 %v271
    %295 = vmatmul.bf16.gmra.mxu0 %v222
    %v296 = vpop.f32.mrf.mxu0
    %v297 = vadd.f32 0.0, %v296
    %v298 = vpop.f32.mrf.mxu0
    %299 = vdwg.mxu0
    %v300 = vld [vmem:[%s5] sm:$0x1]
    %v301 = vld [vmem:[%s6] sm:$0x1]
    %v302 = vrot.slane %v297, 4
    %v303 = vadd.f32 %v297, %v302
    %v304 = vrot.slane %v303, 2
    %v305 = vadd.f32 %v303, %v304
    %v306 = vrot.slane %v305, 1
    %v307 = vadd.f32 %v305, %v306
    %v308 = vmul.f32 %v307, %v187
    %v309 = vsub.f32 %v297, %v308
    %v310 = vmul.f32 %v309, %v309
    %v311 = vrot.slane %v310, 4
    %v312 = vadd.f32 %v310, %v311
    %v313 = vrot.slane %v312, 2
    %v314 = vadd.f32 %v312, %v313
    %v315 = vrot.slane %v314, 1
    %v316 = vadd.f32 %v314, %v315
    %v317 = vmul.f32 %v316, %v187
    %v318 = vadd.f32 %v317, 1e-05
    %v319 = vrsqrt.pop %v318
    %v320 = vmul.f32 %v319, %v318
    %v321 = vmul.f32 %v320, %v319
    %v322 = vmul.f32 0.5, %v321
    %v323 = vsub.f32 1.5, %v322
    %v324 = vmul.f32 %v319, %v323
    %vm325 = vweird.f32 %v318
    %vm326 = vweird.f32 %v319
    %vm327 = vmor %vm325, %vm326
    %v328 = vsel %vm327, %v319, %v324
    %v329 = vmul.f32 %v300, %v328
    %v330 = vmul.f32 %v308, %v329
    %v331 = vsub.f32 %v301, %v330
    %v333 = vperm.slane %v329, 0
    %v335 = vmul.f32 %v297, %v333
    %v337 = vperm.slane %v331, 0
    %v339 = vadd.f32 %v335, %v337
    %v340 = vmul.f32 %v339, 0.01
    %v341 = vmax.f32 %v339, %v340
    %v342 = vpack.c.bf16 %v341, %v341
    %v343 = vld [vmem:[#allocation8] sm:$0xf]
    %v344 = vld [vmem:[#allocation8 + $0x4] sm:$0xf]
    %v345 = vld [vmem:[#allocation8 + $0x8] sm:$0xf]
    %v346 = vld [vmem:[#allocation8 + $0xc] sm:$0xf]
    %v347 = vld [vmem:[#allocation8 + $0x10] sm:$0xf]
    %v348 = vld [vmem:[#allocation8 + $0x14] sm:$0xf]
    %v349 = vld [vmem:[#allocation8 + $0x18] sm:$0xf]
    %v350 = vld [vmem:[#allocation8 + $0x1c] sm:$0xf]
    %v351 = vld [vmem:[#allocation8 + $0x20] sm:$0xf]
    %v352 = vld [vmem:[#allocation8 + $0x24] sm:$0xf]
    %v353 = vld [vmem:[#allocation8 + $0x28] sm:$0xf]
    %v354 = vld [vmem:[#allocation8 + $0x2c] sm:$0xf]
    %v355 = vld [vmem:[#allocation8 + $0x30] sm:$0xf]
    %v356 = vld [vmem:[#allocation8 + $0x34] sm:$0xf]
    %v357 = vld [vmem:[#allocation8 + $0x38] sm:$0xf]
    %v358 = vld [vmem:[#allocation8 + $0x3c] sm:$0xf]
    %v359 = vld [vmem:[%s8] sm:$0x1]
    %v361 = vperm.slane %v359, 0
    %v379 = vunpack.c.l.b16 %v343
    %v380 = vunpack.c.l.b16 %v344
    %v381 = vunpack.c.l.b16 %v345
    %v382 = vunpack.c.l.b16 %v346
    %v383 = vunpack.c.l.b16 %v347
    %v384 = vunpack.c.l.b16 %v348
    %v385 = vunpack.c.l.b16 %v349
    %v386 = vunpack.c.l.b16 %v350
    %v387 = vunpack.c.l.b16 %v351
    %v388 = vunpack.c.l.b16 %v352
    %v389 = vunpack.c.l.b16 %v353
    %v390 = vunpack.c.l.b16 %v354
    %v391 = vunpack.c.l.b16 %v355
    %v392 = vunpack.c.l.b16 %v356
    %v393 = vunpack.c.l.b16 %v357
    %v394 = vunpack.c.l.b16 %v358
    %v395 = vpack.c.b16 %v380, %v379
    %v396 = vpack.c.b16 %v382, %v381
    %v397 = vpack.c.b16 %v384, %v383
    %v398 = vpack.c.b16 %v386, %v385
    %v399 = vpack.c.b16 %v388, %v387
    %v400 = vpack.c.b16 %v390, %v389
    %v401 = vpack.c.b16 %v392, %v391
    %v402 = vpack.c.b16 %v394, %v393
    %411 = vmatpush.bf16.msra.mxu0 %v402
    %412 = vmatpush.bf16.msra.mxu0 %v401
    %413 = vmatpush.bf16.msra.mxu0 %v400
    %414 = vmatpush.bf16.msra.mxu0 %v399
    %415 = vmatpush.bf16.msra.mxu0 %v398
    %416 = vmatpush.bf16.msra.mxu0 %v397
    %417 = vmatpush.bf16.msra.mxu0 %v396
    %418 = vmatpush.bf16.msra.mxu0 %v395
    %419 = vmatmul.bf16.gmra.mxu0 %v342
    %v420 = vpop.f32.mrf.mxu0
    %v421 = vadd.f32 %v361, %v420
    %v422 = vpop.f32.mrf.mxu0
    %423 = vdwg.mxu0
    %424 = vst [vmem:[#allocation10] sm:$0xff] %v421
    // Predicated region
    $region54: #{tpu_custom_call.1} parent=1 // pred_check
      _
    $region55: #{tpu_custom_call.1} parent=1 // pred_check_branch
      %426 = sbr.rel (0) target = $region57
    $region56: #{tpu_custom_call.1} parent=1 // pred_region
      %428 = vsyncadd [#allocation4], 0
      %s430 = sshll.u32 [#allocation10], 4
      %s431 = int_to_ptr.vmem [resolvable:$true] %s430
      %s432 = sshll.u32 %s9, 4
      %s433 = int_to_ptr.hbm [resolvable:$true] %s432
      %435 = dma.vmem_to_hbm [thread:$0]  %s431, 128, %s433, [#allocation4]
    $region57: #{tpu_custom_call.1} parent=1 // pred_fallthru
      _
    // Predicated region
    $region58: #{tpu_custom_call.1} parent=1 // pred_check
      _
    $region59: #{tpu_custom_call.1} parent=1 // pred_check_branch
      %437 = sbr.rel (0) target = $region61
    $region60: #{tpu_custom_call.1} parent=1 // pred_region
      %439 = dma.done [#allocation4], 128
    $region61: #{tpu_custom_call.1} parent=1 // pred_fallthru
      _
    %440 = vsyncpa [#allocation3], 1
    %441 = vsyncpa [#allocation6], 1
    %442 = vsyncpa [#allocation9], 1
    %443 = vsyncpa [#allocation4], 1

</llo_original>
